<compile_context>
chip_gen: v6e
topology: v6e:2x2x1
jax: 0.10.0
libtpu: 0.0.40
codegen_flags: <defaults>
</compile_context>

<pallas_src>
import jax
import jax.numpy as jnp
from jax import lax
from jax.experimental import pallas as pl
from jax.experimental.pallas import tpu as pltpu

EPS = 1e-5  # torch.nn.LayerNorm default


def _embedding_kernel(ids_ref,      # SMEM (batch*seq,) int32 -- scalar prefetch
                      tok_hbm,      # HBM  (vocab, d_model)   -- manual DMA gather
                      pos_ref,      # VMEM (rows, d_model)    -- pos slab tiled block_b times
                      gb_ref,       # VMEM (2, d_model)       -- [gamma; beta]
                      o_ref,        # VMEM (rows, d_model)    -- output tile
                      tok_buf,      # VMEM scratch (rows, d_model)
                      sems):        # DMA semaphores (rows,)
    blk = pl.program_id(0)
    rows, _ = tok_buf.shape          # rows = block_b * seq
    base = blk * rows

    # ---- gather the token-embedding rows for this block ----
    # Issue every row DMA first so they all overlap, then wait on all of them.
    copies = []
    for r in range(rows):
        tid = ids_ref[base + r]
        cp = pltpu.make_async_copy(tok_hbm.at[pl.ds(tid, 1)],
                                   tok_buf.at[pl.ds(r, 1)],
                                   sems.at[r])
        cp.start()
        copies.append(cp)
    for cp in copies:
        cp.wait()

    # ---- embedding = tok_embed(x) + pos_embed(pos) ----
    e = tok_buf[...].astype(jnp.float32) + pos_ref[...].astype(jnp.float32)

    # ---- LayerNorm over d_model (f32 elementwise; rsqrt on EUP) ----
    mu = jnp.mean(e, axis=-1, keepdims=True)
    cen = e - mu
    var = jnp.mean(cen * cen, axis=-1, keepdims=True)
    inv = lax.rsqrt(var + EPS)
    gamma = gb_ref[0:1, :].astype(jnp.float32)
    beta = gb_ref[1:2, :].astype(jnp.float32)
    o_ref[...] = (cen * inv * gamma + beta).astype(o_ref.dtype)


def _pick_block_b(batch, seq, d_model, *, max_rows=256, vmem_budget=8 << 20):
    """Largest divisor of batch whose tile fits comfortably in VMEM and whose
    unrolled DMA count stays bounded."""
    bytes_per_b = seq * d_model * 4 * 4   # tok_buf + pos tile + double-buffered out (rough)
    best = 1
    for cand in range(1, batch + 1):
        if batch % cand:
            continue
        if cand * seq > max_rows or cand * bytes_per_b > vmem_budget:
            break
        best = cand
    return best


def embedding_forward(x, tok_table, pos_table, gamma, beta, *, block_b=None):
    """Pallas-backed equivalent of Embedding.forward."""
    batch, seq = x.shape
    _, d_model = tok_table.shape

    if block_b is None:
        block_b = _pick_block_b(batch, seq, d_model)
    assert batch % block_b == 0
    rows = block_b * seq

    ids_flat = x.reshape(batch * seq).astype(jnp.int32)
    pos_tile = jnp.tile(pos_table[:seq], (block_b, 1))   # (rows, d_model), resident
    gb = jnp.stack([gamma, beta], axis=0)                # 1 operand / 1 DMA

    grid_spec = pltpu.PrefetchScalarGridSpec(
        num_scalar_prefetch=1,                           # token ids -> SMEM
        grid=(batch // block_b,),
        in_specs=[
            pl.BlockSpec(memory_space=pl.ANY),                        # vocab table in HBM
            pl.BlockSpec((rows, d_model), lambda blk, ids: (0, 0)),   # pos slab (resident)
            pl.BlockSpec((2, d_model), lambda blk, ids: (0, 0)),      # gamma/beta (resident)
        ],
        out_specs=pl.BlockSpec((rows, d_model), lambda blk, ids: (blk, 0)),
        scratch_shapes=[
            pltpu.VMEM((rows, d_model), tok_table.dtype),             # gathered tok rows
            pltpu.SemaphoreType.DMA((rows,)),
        ],
    )

    out_flat = pl.pallas_call(
        _embedding_kernel,
        out_shape=jax.ShapeDtypeStruct((batch * seq, d_model), tok_table.dtype),
        grid_spec=grid_spec,
        compiler_params=pltpu.CompilerParams(
            dimension_semantics=("parallel",)),          # blocks are independent
    )(ids_flat, tok_table, pos_tile, gb)

    return out_flat.reshape(batch, seq, d_model)


def ref_forward(x, tok_table, pos_table, gamma, beta):
    """Pure-JAX transcription of the torch Embedding forward."""
    seq = x.shape[1]
    e = tok_table[x] + pos_table[jnp.arange(seq)][None, :, :]
    mu = e.mean(-1, keepdims=True)
    var = ((e - mu) ** 2).mean(-1, keepdims=True)
    return (e - mu) / jnp.sqrt(var + EPS) * gamma + beta


if __name__ == "__main__":
    vocab_size, max_len, d_model = 64, 16, 128
    batch, seq = 2, 8

    root = jax.random.PRNGKey(0)
    k_x, k_tok, k_pos, k_g, k_b = jax.random.split(root, 5)

    x = jax.random.randint(k_x, (batch, seq), 0, vocab_size, dtype=jnp.int32)
    tok_table = jax.random.normal(k_tok, (vocab_size, d_model), jnp.float32)
    pos_table = jax.random.normal(k_pos, (max_len, d_model), jnp.float32)
    gamma = 1.0 + 0.1 * jax.random.normal(k_g, (d_model,), jnp.float32)
    beta = 0.1 * jax.random.normal(k_b, (d_model,), jnp.float32)

    out = jax.block_until_ready(
        embedding_forward(x, tok_table, pos_table, gamma, beta))
    ref = jax.block_until_ready(
        ref_forward(x, tok_table, pos_table, gamma, beta))

    assert out.shape == (batch, seq, d_model)
    assert jnp.allclose(out, ref, atol=1e-4, rtol=1e-4), (
        f"max abs diff {jnp.max(jnp.abs(out - ref))}")
    print("KERNEL_OK")
</pallas_src>

<mosaic_0001>
module attributes {stable_mosaic.version = 11 : i64} {
  func.func @_embedding_kernel(%arg0: i32, %arg1: memref<16xi32, #tpu.memory_space<smem>>, %arg2: memref<64x128xf32, #tpu.memory_space<any>>, %arg3: memref<16x128xf32, #tpu.memory_space<vmem>>, %arg4: memref<2x128xf32, #tpu.memory_space<vmem>>, %arg5: memref<16x128xf32, #tpu.memory_space<vmem>>, %arg6: memref<16x128xf32, #tpu.memory_space<vmem>>, %arg7: memref<16x!tpu.dma_semaphore, #tpu.memory_space<semaphore_mem>>) attributes {dimension_semantics = [#tpu.dimension_semantics<parallel>], iteration_bounds = array<i64: 1>, scalar_prefetch = 1 : i64, scratch_operands = 2 : i64, tpu.core_type = #tpu.core_type<tc>, window_params = [{}, {pipeline_mode = #tpu.pipeline_mode<synchronous>, transform_indices = @transform_1, window_bounds = array<i64: 16, 128>}, {pipeline_mode = #tpu.pipeline_mode<synchronous>, transform_indices = @transform_2, window_bounds = array<i64: 2, 128>}, {transform_indices = @transform_3, window_bounds = array<i64: 16, 128>}]} {
    %c16_i32 = arith.constant 16 : i32
    %0 = arith.muli %arg0, %c16_i32 : i32
    %c0_i32 = arith.constant 0 : i32
    %1 = arith.addi %0, %c0_i32 : i32
    %2 = arith.index_cast %1 : i32 to index
    %3 = memref.load %arg1[%2] : memref<16xi32, #tpu.memory_space<smem>>
    %c0_i32_0 = arith.constant 0 : i32
    %c0_i32_1 = arith.constant 0 : i32
    %4 = tpu.memref_slice %arg2[%3, %c0_i32_1] : memref<64x128xf32, #tpu.memory_space<any>> -> memref<1x128xf32, #tpu.memory_space<any>>
    %c0_i32_2 = arith.constant 0 : i32
    %c0_i32_3 = arith.constant 0 : i32
    %5 = tpu.memref_slice %arg6[%c0_i32_2, %c0_i32_3] : memref<16x128xf32, #tpu.memory_space<vmem>> -> memref<1x128xf32, #tpu.memory_space<vmem>>
    %6 = tpu.memref_slice %arg7[%c0_i32_0] : memref<16x!tpu.dma_semaphore, #tpu.memory_space<semaphore_mem>> -> memref<1x!tpu.dma_semaphore, #tpu.memory_space<semaphore_mem>>
    %7 = tpu.memref_squeeze %6 : memref<1x!tpu.dma_semaphore, #tpu.memory_space<semaphore_mem>> -> memref<!tpu.dma_semaphore, #tpu.memory_space<semaphore_mem>>
    tpu.enqueue_dma source(%4 : memref<1x128xf32, #tpu.memory_space<any>>) target(%5 : memref<1x128xf32, #tpu.memory_space<vmem>>) target_semaphore(%7 : memref<!tpu.dma_semaphore, #tpu.memory_space<semaphore_mem>>)
    %c1_i32 = arith.constant 1 : i32
    %8 = arith.addi %0, %c1_i32 : i32
    %9 = arith.index_cast %8 : i32 to index
    %10 = memref.load %arg1[%9] : memref<16xi32, #tpu.memory_space<smem>>
    %c1_i32_4 = arith.constant 1 : i32
    %c0_i32_5 = arith.constant 0 : i32
    %11 = tpu.memref_slice %arg2[%10, %c0_i32_5] : memref<64x128xf32, #tpu.memory_space<any>> -> memref<1x128xf32, #tpu.memory_space<any>>
    %c1_i32_6 = arith.constant 1 : i32
    %c0_i32_7 = arith.constant 0 : i32
    %12 = tpu.memref_slice %arg6[%c1_i32_6, %c0_i32_7] : memref<16x128xf32, #tpu.memory_space<vmem>> -> memref<1x128xf32, #tpu.memory_space<vmem>>
    %13 = tpu.memref_slice %arg7[%c1_i32_4] : memref<16x!tpu.dma_semaphore, #tpu.memory_space<semaphore_mem>> -> memref<1x!tpu.dma_semaphore, #tpu.memory_space<semaphore_mem>>
    %14 = tpu.memref_squeeze %13 : memref<1x!tpu.dma_semaphore, #tpu.memory_space<semaphore_mem>> -> memref<!tpu.dma_semaphore, #tpu.memory_space<semaphore_mem>>
    tpu.enqueue_dma source(%11 : memref<1x128xf32, #tpu.memory_space<any>>) target(%12 : memref<1x128xf32, #tpu.memory_space<vmem>>) target_semaphore(%14 : memref<!tpu.dma_semaphore, #tpu.memory_space<semaphore_mem>>)
    %c2_i32 = arith.constant 2 : i32
    %15 = arith.addi %0, %c2_i32 : i32
    %16 = arith.index_cast %15 : i32 to index
    %17 = memref.load %arg1[%16] : memref<16xi32, #tpu.memory_space<smem>>
    %c2_i32_8 = arith.constant 2 : i32
    %c0_i32_9 = arith.constant 0 : i32
    %18 = tpu.memref_slice %arg2[%17, %c0_i32_9] : memref<64x128xf32, #tpu.memory_space<any>> -> memref<1x128xf32, #tpu.memory_space<any>>
    %c2_i32_10 = arith.constant 2 : i32
    %c0_i32_11 = arith.constant 0 : i32
    %19 = tpu.memref_slice %arg6[%c2_i32_10, %c0_i32_11] : memref<16x128xf32, #tpu.memory_space<vmem>> -> memref<1x128xf32, #tpu.memory_space<vmem>>
    %20 = tpu.memref_slice %arg7[%c2_i32_8] : memref<16x!tpu.dma_semaphore, #tpu.memory_space<semaphore_mem>> -> memref<1x!tpu.dma_semaphore, #tpu.memory_space<semaphore_mem>>
    %21 = tpu.memref_squeeze %20 : memref<1x!tpu.dma_semaphore, #tpu.memory_space<semaphore_mem>> -> memref<!tpu.dma_semaphore, #tpu.memory_space<semaphore_mem>>
    tpu.enqueue_dma source(%18 : memref<1x128xf32, #tpu.memory_space<any>>) target(%19 : memref<1x128xf32, #tpu.memory_space<vmem>>) target_semaphore(%21 : memref<!tpu.dma_semaphore, #tpu.memory_space<semaphore_mem>>)
    %c3_i32 = arith.constant 3 : i32
    %22 = arith.addi %0, %c3_i32 : i32
    %23 = arith.index_cast %22 : i32 to index
    %24 = memref.load %arg1[%23] : memref<16xi32, #tpu.memory_space<smem>>
    %c3_i32_12 = arith.constant 3 : i32
    %c0_i32_13 = arith.constant 0 : i32
    %25 = tpu.memref_slice %arg2[%24, %c0_i32_13] : memref<64x128xf32, #tpu.memory_space<any>> -> memref<1x128xf32, #tpu.memory_space<any>>
    %c3_i32_14 = arith.constant 3 : i32
    %c0_i32_15 = arith.constant 0 : i32
    %26 = tpu.memref_slice %arg6[%c3_i32_14, %c0_i32_15] : memref<16x128xf32, #tpu.memory_space<vmem>> -> memref<1x128xf32, #tpu.memory_space<vmem>>
    %27 = tpu.memref_slice %arg7[%c3_i32_12] : memref<16x!tpu.dma_semaphore, #tpu.memory_space<semaphore_mem>> -> memref<1x!tpu.dma_semaphore, #tpu.memory_space<semaphore_mem>>
    %28 = tpu.memref_squeeze %27 : memref<1x!tpu.dma_semaphore, #tpu.memory_space<semaphore_mem>> -> memref<!tpu.dma_semaphore, #tpu.memory_space<semaphore_mem>>
    tpu.enqueue_dma source(%25 : memref<1x128xf32, #tpu.memory_space<any>>) target(%26 : memref<1x128xf32, #tpu.memory_space<vmem>>) target_semaphore(%28 : memref<!tpu.dma_semaphore, #tpu.memory_space<semaphore_mem>>)
    %c4_i32 = arith.constant 4 : i32
    %29 = arith.addi %0, %c4_i32 : i32
    %30 = arith.index_cast %29 : i32 to index
    %31 = memref.load %arg1[%30] : memref<16xi32, #tpu.memory_space<smem>>
    %c4_i32_16 = arith.constant 4 : i32
    %c0_i32_17 = arith.constant 0 : i32
    %32 = tpu.memref_slice %arg2[%31, %c0_i32_17] : memref<64x128xf32, #tpu.memory_space<any>> -> memref<1x128xf32, #tpu.memory_space<any>>
    %c4_i32_18 = arith.constant 4 : i32
    %c0_i32_19 = arith.constant 0 : i32
    %33 = tpu.memref_slice %arg6[%c4_i32_18, %c0_i32_19] : memref<16x128xf32, #tpu.memory_space<vmem>> -> memref<1x128xf32, #tpu.memory_space<vmem>>
    %34 = tpu.memref_slice %arg7[%c4_i32_16] : memref<16x!tpu.dma_semaphore, #tpu.memory_space<semaphore_mem>> -> memref<1x!tpu.dma_semaphore, #tpu.memory_space<semaphore_mem>>
    %35 = tpu.memref_squeeze %34 : memref<1x!tpu.dma_semaphore, #tpu.memory_space<semaphore_mem>> -> memref<!tpu.dma_semaphore, #tpu.memory_space<semaphore_mem>>
    tpu.enqueue_dma source(%32 : memref<1x128xf32, #tpu.memory_space<any>>) target(%33 : memref<1x128xf32, #tpu.memory_space<vmem>>) target_semaphore(%35 : memref<!tpu.dma_semaphore, #tpu.memory_space<semaphore_mem>>)
    %c5_i32 = arith.constant 5 : i32
    %36 = arith.addi %0, %c5_i32 : i32
    %37 = arith.index_cast %36 : i32 to index
    %38 = memref.load %arg1[%37] : memref<16xi32, #tpu.memory_space<smem>>
    %c5_i32_20 = arith.constant 5 : i32
    %c0_i32_21 = arith.constant 0 : i32
    %39 = tpu.memref_slice %arg2[%38, %c0_i32_21] : memref<64x128xf32, #tpu.memory_space<any>> -> memref<1x128xf32, #tpu.memory_space<any>>
    %c5_i32_22 = arith.constant 5 : i32
    %c0_i32_23 = arith.constant 0 : i32
    %40 = tpu.memref_slice %arg6[%c5_i32_22, %c0_i32_23] : memref<16x128xf32, #tpu.memory_space<vmem>> -> memref<1x128xf32, #tpu.memory_space<vmem>>
    %41 = tpu.memref_slice %arg7[%c5_i32_20] : memref<16x!tpu.dma_semaphore, #tpu.memory_space<semaphore_mem>> -> memref<1x!tpu.dma_semaphore, #tpu.memory_space<semaphore_mem>>
    %42 = tpu.memref_squeeze %41 : memref<1x!tpu.dma_semaphore, #tpu.memory_space<semaphore_mem>> -> memref<!tpu.dma_semaphore, #tpu.memory_space<semaphore_mem>>
    tpu.enqueue_dma source(%39 : memref<1x128xf32, #tpu.memory_space<any>>) target(%40 : memref<1x128xf32, #tpu.memory_space<vmem>>) target_semaphore(%42 : memref<!tpu.dma_semaphore, #tpu.memory_space<semaphore_mem>>)
    %c6_i32 = arith.constant 6 : i32
    %43 = arith.addi %0, %c6_i32 : i32
    %44 = arith.index_cast %43 : i32 to index
    %45 = memref.load %arg1[%44] : memref<16xi32, #tpu.memory_space<smem>>
    %c6_i32_24 = arith.constant 6 : i32
    %c0_i32_25 = arith.constant 0 : i32
    %46 = tpu.memref_slice %arg2[%45, %c0_i32_25] : memref<64x128xf32, #tpu.memory_space<any>> -> memref<1x128xf32, #tpu.memory_space<any>>
    %c6_i32_26 = arith.constant 6 : i32
    %c0_i32_27 = arith.constant 0 : i32
    %47 = tpu.memref_slice %arg6[%c6_i32_26, %c0_i32_27] : memref<16x128xf32, #tpu.memory_space<vmem>> -> memref<1x128xf32, #tpu.memory_space<vmem>>
    %48 = tpu.memref_slice %arg7[%c6_i32_24] : memref<16x!tpu.dma_semaphore, #tpu.memory_space<semaphore_mem>> -> memref<1x!tpu.dma_semaphore, #tpu.memory_space<semaphore_mem>>
    %49 = tpu.memref_squeeze %48 : memref<1x!tpu.dma_semaphore, #tpu.memory_space<semaphore_mem>> -> memref<!tpu.dma_semaphore, #tpu.memory_space<semaphore_mem>>
    tpu.enqueue_dma source(%46 : memref<1x128xf32, #tpu.memory_space<any>>) target(%47 : memref<1x128xf32, #tpu.memory_space<vmem>>) target_semaphore(%49 : memref<!tpu.dma_semaphore, #tpu.memory_space<semaphore_mem>>)
    %c7_i32 = arith.constant 7 : i32
    %50 = arith.addi %0, %c7_i32 : i32
    %51 = arith.index_cast %50 : i32 to index
    %52 = memref.load %arg1[%51] : memref<16xi32, #tpu.memory_space<smem>>
    %c7_i32_28 = arith.constant 7 : i32
    %c0_i32_29 = arith.constant 0 : i32
    %53 = tpu.memref_slice %arg2[%52, %c0_i32_29] : memref<64x128xf32, #tpu.memory_space<any>> -> memref<1x128xf32, #tpu.memory_space<any>>
    %c7_i32_30 = arith.constant 7 : i32
    %c0_i32_31 = arith.constant 0 : i32
    %54 = tpu.memref_slice %arg6[%c7_i32_30, %c0_i32_31] : memref<16x128xf32, #tpu.memory_space<vmem>> -> memref<1x128xf32, #tpu.memory_space<vmem>>
    %55 = tpu.memref_slice %arg7[%c7_i32_28] : memref<16x!tpu.dma_semaphore, #tpu.memory_space<semaphore_mem>> -> memref<1x!tpu.dma_semaphore, #tpu.memory_space<semaphore_mem>>
    %56 = tpu.memref_squeeze %55 : memref<1x!tpu.dma_semaphore, #tpu.memory_space<semaphore_mem>> -> memref<!tpu.dma_semaphore, #tpu.memory_space<semaphore_mem>>
    tpu.enqueue_dma source(%53 : memref<1x128xf32, #tpu.memory_space<any>>) target(%54 : memref<1x128xf32, #tpu.memory_space<vmem>>) target_semaphore(%56 : memref<!tpu.dma_semaphore, #tpu.memory_space<semaphore_mem>>)
    %c8_i32 = arith.constant 8 : i32
    %57 = arith.addi %0, %c8_i32 : i32
    %58 = arith.index_cast %57 : i32 to index
    %59 = memref.load %arg1[%58] : memref<16xi32, #tpu.memory_space<smem>>
    %c8_i32_32 = arith.constant 8 : i32
    %c0_i32_33 = arith.constant 0 : i32
    %60 = tpu.memref_slice %arg2[%59, %c0_i32_33] : memref<64x128xf32, #tpu.memory_space<any>> -> memref<1x128xf32, #tpu.memory_space<any>>
    %c8_i32_34 = arith.constant 8 : i32
    %c0_i32_35 = arith.constant 0 : i32
    %61 = tpu.memref_slice %arg6[%c8_i32_34, %c0_i32_35] : memref<16x128xf32, #tpu.memory_space<vmem>> -> memref<1x128xf32, #tpu.memory_space<vmem>>
    %62 = tpu.memref_slice %arg7[%c8_i32_32] : memref<16x!tpu.dma_semaphore, #tpu.memory_space<semaphore_mem>> -> memref<1x!tpu.dma_semaphore, #tpu.memory_space<semaphore_mem>>
    %63 = tpu.memref_squeeze %62 : memref<1x!tpu.dma_semaphore, #tpu.memory_space<semaphore_mem>> -> memref<!tpu.dma_semaphore, #tpu.memory_space<semaphore_mem>>
    tpu.enqueue_dma source(%60 : memref<1x128xf32, #tpu.memory_space<any>>) target(%61 : memref<1x128xf32, #tpu.memory_space<vmem>>) target_semaphore(%63 : memref<!tpu.dma_semaphore, #tpu.memory_space<semaphore_mem>>)
    %c9_i32 = arith.constant 9 : i32
    %64 = arith.addi %0, %c9_i32 : i32
    %65 = arith.index_cast %64 : i32 to index
    %66 = memref.load %arg1[%65] : memref<16xi32, #tpu.memory_space<smem>>
    %c9_i32_36 = arith.constant 9 : i32
    %c0_i32_37 = arith.constant 0 : i32
    %67 = tpu.memref_slice %arg2[%66, %c0_i32_37] : memref<64x128xf32, #tpu.memory_space<any>> -> memref<1x128xf32, #tpu.memory_space<any>>
    %c9_i32_38 = arith.constant 9 : i32
    %c0_i32_39 = arith.constant 0 : i32
    %68 = tpu.memref_slice %arg6[%c9_i32_38, %c0_i32_39] : memref<16x128xf32, #tpu.memory_space<vmem>> -> memref<1x128xf32, #tpu.memory_space<vmem>>
    %69 = tpu.memref_slice %arg7[%c9_i32_36] : memref<16x!tpu.dma_semaphore, #tpu.memory_space<semaphore_mem>> -> memref<1x!tpu.dma_semaphore, #tpu.memory_space<semaphore_mem>>
    %70 = tpu.memref_squeeze %69 : memref<1x!tpu.dma_semaphore, #tpu.memory_space<semaphore_mem>> -> memref<!tpu.dma_semaphore, #tpu.memory_space<semaphore_mem>>
    tpu.enqueue_dma source(%67 : memref<1x128xf32, #tpu.memory_space<any>>) target(%68 : memref<1x128xf32, #tpu.memory_space<vmem>>) target_semaphore(%70 : memref<!tpu.dma_semaphore, #tpu.memory_space<semaphore_mem>>)
    %c10_i32 = arith.constant 10 : i32
    %71 = arith.addi %0, %c10_i32 : i32
    %72 = arith.index_cast %71 : i32 to index
    %73 = memref.load %arg1[%72] : memref<16xi32, #tpu.memory_space<smem>>
    %c10_i32_40 = arith.constant 10 : i32
    %c0_i32_41 = arith.constant 0 : i32
    %74 = tpu.memref_slice %arg2[%73, %c0_i32_41] : memref<64x128xf32, #tpu.memory_space<any>> -> memref<1x128xf32, #tpu.memory_space<any>>
    %c10_i32_42 = arith.constant 10 : i32
    %c0_i32_43 = arith.constant 0 : i32
    %75 = tpu.memref_slice %arg6[%c10_i32_42, %c0_i32_43] : memref<16x128xf32, #tpu.memory_space<vmem>> -> memref<1x128xf32, #tpu.memory_space<vmem>>
    %76 = tpu.memref_slice %arg7[%c10_i32_40] : memref<16x!tpu.dma_semaphore, #tpu.memory_space<semaphore_mem>> -> memref<1x!tpu.dma_semaphore, #tpu.memory_space<semaphore_mem>>
    %77 = tpu.memref_squeeze %76 : memref<1x!tpu.dma_semaphore, #tpu.memory_space<semaphore_mem>> -> memref<!tpu.dma_semaphore, #tpu.memory_space<semaphore_mem>>
    tpu.enqueue_dma source(%74 : memref<1x128xf32, #tpu.memory_space<any>>) target(%75 : memref<1x128xf32, #tpu.memory_space<vmem>>) target_semaphore(%77 : memref<!tpu.dma_semaphore, #tpu.memory_space<semaphore_mem>>)
    %c11_i32 = arith.constant 11 : i32
    %78 = arith.addi %0, %c11_i32 : i32
    %79 = arith.index_cast %78 : i32 to index
    %80 = memref.load %arg1[%79] : memref<16xi32, #tpu.memory_space<smem>>
    %c11_i32_44 = arith.constant 11 : i32
    %c0_i32_45 = arith.constant 0 : i32
    %81 = tpu.memref_slice %arg2[%80, %c0_i32_45] : memref<64x128xf32, #tpu.memory_space<any>> -> memref<1x128xf32, #tpu.memory_space<any>>
    %c11_i32_46 = arith.constant 11 : i32
    %c0_i32_47 = arith.constant 0 : i32
    %82 = tpu.memref_slice %arg6[%c11_i32_46, %c0_i32_47] : memref<16x128xf32, #tpu.memory_space<vmem>> -> memref<1x128xf32, #tpu.memory_space<vmem>>
    %83 = tpu.memref_slice %arg7[%c11_i32_44] : memref<16x!tpu.dma_semaphore, #tpu.memory_space<semaphore_mem>> -> memref<1x!tpu.dma_semaphore, #tpu.memory_space<semaphore_mem>>
    %84 = tpu.memref_squeeze %83 : memref<1x!tpu.dma_semaphore, #tpu.memory_space<semaphore_mem>> -> memref<!tpu.dma_semaphore, #tpu.memory_space<semaphore_mem>>
    tpu.enqueue_dma source(%81 : memref<1x128xf32, #tpu.memory_space<any>>) target(%82 : memref<1x128xf32, #tpu.memory_space<vmem>>) target_semaphore(%84 : memref<!tpu.dma_semaphore, #tpu.memory_space<semaphore_mem>>)
    %c12_i32 = arith.constant 12 : i32
    %85 = arith.addi %0, %c12_i32 : i32
    %86 = arith.index_cast %85 : i32 to index
    %87 = memref.load %arg1[%86] : memref<16xi32, #tpu.memory_space<smem>>
    %c12_i32_48 = arith.constant 12 : i32
    %c0_i32_49 = arith.constant 0 : i32
    %88 = tpu.memref_slice %arg2[%87, %c0_i32_49] : memref<64x128xf32, #tpu.memory_space<any>> -> memref<1x128xf32, #tpu.memory_space<any>>
    %c12_i32_50 = arith.constant 12 : i32
    %c0_i32_51 = arith.constant 0 : i32
    %89 = tpu.memref_slice %arg6[%c12_i32_50, %c0_i32_51] : memref<16x128xf32, #tpu.memory_space<vmem>> -> memref<1x128xf32, #tpu.memory_space<vmem>>
    %90 = tpu.memref_slice %arg7[%c12_i32_48] : memref<16x!tpu.dma_semaphore, #tpu.memory_space<semaphore_mem>> -> memref<1x!tpu.dma_semaphore, #tpu.memory_space<semaphore_mem>>
    %91 = tpu.memref_squeeze %90 : memref<1x!tpu.dma_semaphore, #tpu.memory_space<semaphore_mem>> -> memref<!tpu.dma_semaphore, #tpu.memory_space<semaphore_mem>>
    tpu.enqueue_dma source(%88 : memref<1x128xf32, #tpu.memory_space<any>>) target(%89 : memref<1x128xf32, #tpu.memory_space<vmem>>) target_semaphore(%91 : memref<!tpu.dma_semaphore, #tpu.memory_space<semaphore_mem>>)
    %c13_i32 = arith.constant 13 : i32
    %92 = arith.addi %0, %c13_i32 : i32
    %93 = arith.index_cast %92 : i32 to index
    %94 = memref.load %arg1[%93] : memref<16xi32, #tpu.memory_space<smem>>
    %c13_i32_52 = arith.constant 13 : i32
    %c0_i32_53 = arith.constant 0 : i32
    %95 = tpu.memref_slice %arg2[%94, %c0_i32_53] : memref<64x128xf32, #tpu.memory_space<any>> -> memref<1x128xf32, #tpu.memory_space<any>>
    %c13_i32_54 = arith.constant 13 : i32
    %c0_i32_55 = arith.constant 0 : i32
    %96 = tpu.memref_slice %arg6[%c13_i32_54, %c0_i32_55] : memref<16x128xf32, #tpu.memory_space<vmem>> -> memref<1x128xf32, #tpu.memory_space<vmem>>
    %97 = tpu.memref_slice %arg7[%c13_i32_52] : memref<16x!tpu.dma_semaphore, #tpu.memory_space<semaphore_mem>> -> memref<1x!tpu.dma_semaphore, #tpu.memory_space<semaphore_mem>>
    %98 = tpu.memref_squeeze %97 : memref<1x!tpu.dma_semaphore, #tpu.memory_space<semaphore_mem>> -> memref<!tpu.dma_semaphore, #tpu.memory_space<semaphore_mem>>
    tpu.enqueue_dma source(%95 : memref<1x128xf32, #tpu.memory_space<any>>) target(%96 : memref<1x128xf32, #tpu.memory_space<vmem>>) target_semaphore(%98 : memref<!tpu.dma_semaphore, #tpu.memory_space<semaphore_mem>>)
    %c14_i32 = arith.constant 14 : i32
    %99 = arith.addi %0, %c14_i32 : i32
    %100 = arith.index_cast %99 : i32 to index
    %101 = memref.load %arg1[%100] : memref<16xi32, #tpu.memory_space<smem>>
    %c14_i32_56 = arith.constant 14 : i32
    %c0_i32_57 = arith.constant 0 : i32
    %102 = tpu.memref_slice %arg2[%101, %c0_i32_57] : memref<64x128xf32, #tpu.memory_space<any>> -> memref<1x128xf32, #tpu.memory_space<any>>
    %c14_i32_58 = arith.constant 14 : i32
    %c0_i32_59 = arith.constant 0 : i32
    %103 = tpu.memref_slice %arg6[%c14_i32_58, %c0_i32_59] : memref<16x128xf32, #tpu.memory_space<vmem>> -> memref<1x128xf32, #tpu.memory_space<vmem>>
    %104 = tpu.memref_slice %arg7[%c14_i32_56] : memref<16x!tpu.dma_semaphore, #tpu.memory_space<semaphore_mem>> -> memref<1x!tpu.dma_semaphore, #tpu.memory_space<semaphore_mem>>
    %105 = tpu.memref_squeeze %104 : memref<1x!tpu.dma_semaphore, #tpu.memory_space<semaphore_mem>> -> memref<!tpu.dma_semaphore, #tpu.memory_space<semaphore_mem>>
    tpu.enqueue_dma source(%102 : memref<1x128xf32, #tpu.memory_space<any>>) target(%103 : memref<1x128xf32, #tpu.memory_space<vmem>>) target_semaphore(%105 : memref<!tpu.dma_semaphore, #tpu.memory_space<semaphore_mem>>)
    %c15_i32 = arith.constant 15 : i32
    %106 = arith.addi %0, %c15_i32 : i32
    %107 = arith.index_cast %106 : i32 to index
    %108 = memref.load %arg1[%107] : memref<16xi32, #tpu.memory_space<smem>>
    %c15_i32_60 = arith.constant 15 : i32
    %c0_i32_61 = arith.constant 0 : i32
    %109 = tpu.memref_slice %arg2[%108, %c0_i32_61] : memref<64x128xf32, #tpu.memory_space<any>> -> memref<1x128xf32, #tpu.memory_space<any>>
    %c15_i32_62 = arith.constant 15 : i32
    %c0_i32_63 = arith.constant 0 : i32
    %110 = tpu.memref_slice %arg6[%c15_i32_62, %c0_i32_63] : memref<16x128xf32, #tpu.memory_space<vmem>> -> memref<1x128xf32, #tpu.memory_space<vmem>>
    %111 = tpu.memref_slice %arg7[%c15_i32_60] : memref<16x!tpu.dma_semaphore, #tpu.memory_space<semaphore_mem>> -> memref<1x!tpu.dma_semaphore, #tpu.memory_space<semaphore_mem>>
    %112 = tpu.memref_squeeze %111 : memref<1x!tpu.dma_semaphore, #tpu.memory_space<semaphore_mem>> -> memref<!tpu.dma_semaphore, #tpu.memory_space<semaphore_mem>>
    tpu.enqueue_dma source(%109 : memref<1x128xf32, #tpu.memory_space<any>>) target(%110 : memref<1x128xf32, #tpu.memory_space<vmem>>) target_semaphore(%112 : memref<!tpu.dma_semaphore, #tpu.memory_space<semaphore_mem>>)
    %c0_i32_64 = arith.constant 0 : i32
    %c0_i32_65 = arith.constant 0 : i32
    %113 = tpu.memref_slice %arg2[%3, %c0_i32_65] : memref<64x128xf32, #tpu.memory_space<any>> -> memref<1x128xf32, #tpu.memory_space<any>>
    %c0_i32_66 = arith.constant 0 : i32
    %c0_i32_67 = arith.constant 0 : i32
    %114 = tpu.memref_slice %arg6[%c0_i32_66, %c0_i32_67] : memref<16x128xf32, #tpu.memory_space<vmem>> -> memref<1x128xf32, #tpu.memory_space<vmem>>
    %115 = tpu.memref_slice %arg7[%c0_i32_64] : memref<16x!tpu.dma_semaphore, #tpu.memory_space<semaphore_mem>> -> memref<1x!tpu.dma_semaphore, #tpu.memory_space<semaphore_mem>>
    %116 = tpu.memref_squeeze %115 : memref<1x!tpu.dma_semaphore, #tpu.memory_space<semaphore_mem>> -> memref<!tpu.dma_semaphore, #tpu.memory_space<semaphore_mem>>
    tpu.wait_dma2 semaphore(%116 : memref<!tpu.dma_semaphore, #tpu.memory_space<semaphore_mem>>) src(%113 : memref<1x128xf32, #tpu.memory_space<any>>) dst(%114 : memref<1x128xf32, #tpu.memory_space<vmem>>)
    %c1_i32_68 = arith.constant 1 : i32
    %c0_i32_69 = arith.constant 0 : i32
    %117 = tpu.memref_slice %arg2[%10, %c0_i32_69] : memref<64x128xf32, #tpu.memory_space<any>> -> memref<1x128xf32, #tpu.memory_space<any>>
    %c1_i32_70 = arith.constant 1 : i32
    %c0_i32_71 = arith.constant 0 : i32
    %118 = tpu.memref_slice %arg6[%c1_i32_70, %c0_i32_71] : memref<16x128xf32, #tpu.memory_space<vmem>> -> memref<1x128xf32, #tpu.memory_space<vmem>>
    %119 = tpu.memref_slice %arg7[%c1_i32_68] : memref<16x!tpu.dma_semaphore, #tpu.memory_space<semaphore_mem>> -> memref<1x!tpu.dma_semaphore, #tpu.memory_space<semaphore_mem>>
    %120 = tpu.memref_squeeze %119 : memref<1x!tpu.dma_semaphore, #tpu.memory_space<semaphore_mem>> -> memref<!tpu.dma_semaphore, #tpu.memory_space<semaphore_mem>>
    tpu.wait_dma2 semaphore(%120 : memref<!tpu.dma_semaphore, #tpu.memory_space<semaphore_mem>>) src(%117 : memref<1x128xf32, #tpu.memory_space<any>>) dst(%118 : memref<1x128xf32, #tpu.memory_space<vmem>>)
    %c2_i32_72 = arith.constant 2 : i32
    %c0_i32_73 = arith.constant 0 : i32
    %121 = tpu.memref_slice %arg2[%17, %c0_i32_73] : memref<64x128xf32, #tpu.memory_space<any>> -> memref<1x128xf32, #tpu.memory_space<any>>
    %c2_i32_74 = arith.constant 2 : i32
    %c0_i32_75 = arith.constant 0 : i32
    %122 = tpu.memref_slice %arg6[%c2_i32_74, %c0_i32_75] : memref<16x128xf32, #tpu.memory_space<vmem>> -> memref<1x128xf32, #tpu.memory_space<vmem>>
    %123 = tpu.memref_slice %arg7[%c2_i32_72] : memref<16x!tpu.dma_semaphore, #tpu.memory_space<semaphore_mem>> -> memref<1x!tpu.dma_semaphore, #tpu.memory_space<semaphore_mem>>
    %124 = tpu.memref_squeeze %123 : memref<1x!tpu.dma_semaphore, #tpu.memory_space<semaphore_mem>> -> memref<!tpu.dma_semaphore, #tpu.memory_space<semaphore_mem>>
    tpu.wait_dma2 semaphore(%124 : memref<!tpu.dma_semaphore, #tpu.memory_space<semaphore_mem>>) src(%121 : memref<1x128xf32, #tpu.memory_space<any>>) dst(%122 : memref<1x128xf32, #tpu.memory_space<vmem>>)
    %c3_i32_76 = arith.constant 3 : i32
    %c0_i32_77 = arith.constant 0 : i32
    %125 = tpu.memref_slice %arg2[%24, %c0_i32_77] : memref<64x128xf32, #tpu.memory_space<any>> -> memref<1x128xf32, #tpu.memory_space<any>>
    %c3_i32_78 = arith.constant 3 : i32
    %c0_i32_79 = arith.constant 0 : i32
    %126 = tpu.memref_slice %arg6[%c3_i32_78, %c0_i32_79] : memref<16x128xf32, #tpu.memory_space<vmem>> -> memref<1x128xf32, #tpu.memory_space<vmem>>
    %127 = tpu.memref_slice %arg7[%c3_i32_76] : memref<16x!tpu.dma_semaphore, #tpu.memory_space<semaphore_mem>> -> memref<1x!tpu.dma_semaphore, #tpu.memory_space<semaphore_mem>>
    %128 = tpu.memref_squeeze %127 : memref<1x!tpu.dma_semaphore, #tpu.memory_space<semaphore_mem>> -> memref<!tpu.dma_semaphore, #tpu.memory_space<semaphore_mem>>
    tpu.wait_dma2 semaphore(%128 : memref<!tpu.dma_semaphore, #tpu.memory_space<semaphore_mem>>) src(%125 : memref<1x128xf32, #tpu.memory_space<any>>) dst(%126 : memref<1x128xf32, #tpu.memory_space<vmem>>)
    %c4_i32_80 = arith.constant 4 : i32
    %c0_i32_81 = arith.constant 0 : i32
    %129 = tpu.memref_slice %arg2[%31, %c0_i32_81] : memref<64x128xf32, #tpu.memory_space<any>> -> memref<1x128xf32, #tpu.memory_space<any>>
    %c4_i32_82 = arith.constant 4 : i32
    %c0_i32_83 = arith.constant 0 : i32
    %130 = tpu.memref_slice %arg6[%c4_i32_82, %c0_i32_83] : memref<16x128xf32, #tpu.memory_space<vmem>> -> memref<1x128xf32, #tpu.memory_space<vmem>>
    %131 = tpu.memref_slice %arg7[%c4_i32_80] : memref<16x!tpu.dma_semaphore, #tpu.memory_space<semaphore_mem>> -> memref<1x!tpu.dma_semaphore, #tpu.memory_space<semaphore_mem>>
    %132 = tpu.memref_squeeze %131 : memref<1x!tpu.dma_semaphore, #tpu.memory_space<semaphore_mem>> -> memref<!tpu.dma_semaphore, #tpu.memory_space<semaphore_mem>>
    tpu.wait_dma2 semaphore(%132 : memref<!tpu.dma_semaphore, #tpu.memory_space<semaphore_mem>>) src(%129 : memref<1x128xf32, #tpu.memory_space<any>>) dst(%130 : memref<1x128xf32, #tpu.memory_space<vmem>>)
    %c5_i32_84 = arith.constant 5 : i32
    %c0_i32_85 = arith.constant 0 : i32
    %133 = tpu.memref_slice %arg2[%38, %c0_i32_85] : memref<64x128xf32, #tpu.memory_space<any>> -> memref<1x128xf32, #tpu.memory_space<any>>
    %c5_i32_86 = arith.constant 5 : i32
    %c0_i32_87 = arith.constant 0 : i32
    %134 = tpu.memref_slice %arg6[%c5_i32_86, %c0_i32_87] : memref<16x128xf32, #tpu.memory_space<vmem>> -> memref<1x128xf32, #tpu.memory_space<vmem>>
    %135 = tpu.memref_slice %arg7[%c5_i32_84] : memref<16x!tpu.dma_semaphore, #tpu.memory_space<semaphore_mem>> -> memref<1x!tpu.dma_semaphore, #tpu.memory_space<semaphore_mem>>
    %136 = tpu.memref_squeeze %135 : memref<1x!tpu.dma_semaphore, #tpu.memory_space<semaphore_mem>> -> memref<!tpu.dma_semaphore, #tpu.memory_space<semaphore_mem>>
    tpu.wait_dma2 semaphore(%136 : memref<!tpu.dma_semaphore, #tpu.memory_space<semaphore_mem>>) src(%133 : memref<1x128xf32, #tpu.memory_space<any>>) dst(%134 : memref<1x128xf32, #tpu.memory_space<vmem>>)
    %c6_i32_88 = arith.constant 6 : i32
    %c0_i32_89 = arith.constant 0 : i32
    %137 = tpu.memref_slice %arg2[%45, %c0_i32_89] : memref<64x128xf32, #tpu.memory_space<any>> -> memref<1x128xf32, #tpu.memory_space<any>>
    %c6_i32_90 = arith.constant 6 : i32
    %c0_i32_91 = arith.constant 0 : i32
    %138 = tpu.memref_slice %arg6[%c6_i32_90, %c0_i32_91] : memref<16x128xf32, #tpu.memory_space<vmem>> -> memref<1x128xf32, #tpu.memory_space<vmem>>
    %139 = tpu.memref_slice %arg7[%c6_i32_88] : memref<16x!tpu.dma_semaphore, #tpu.memory_space<semaphore_mem>> -> memref<1x!tpu.dma_semaphore, #tpu.memory_space<semaphore_mem>>
    %140 = tpu.memref_squeeze %139 : memref<1x!tpu.dma_semaphore, #tpu.memory_space<semaphore_mem>> -> memref<!tpu.dma_semaphore, #tpu.memory_space<semaphore_mem>>
    tpu.wait_dma2 semaphore(%140 : memref<!tpu.dma_semaphore, #tpu.memory_space<semaphore_mem>>) src(%137 : memref<1x128xf32, #tpu.memory_space<any>>) dst(%138 : memref<1x128xf32, #tpu.memory_space<vmem>>)
    %c7_i32_92 = arith.constant 7 : i32
    %c0_i32_93 = arith.constant 0 : i32
    %141 = tpu.memref_slice %arg2[%52, %c0_i32_93] : memref<64x128xf32, #tpu.memory_space<any>> -> memref<1x128xf32, #tpu.memory_space<any>>
    %c7_i32_94 = arith.constant 7 : i32
    %c0_i32_95 = arith.constant 0 : i32
    %142 = tpu.memref_slice %arg6[%c7_i32_94, %c0_i32_95] : memref<16x128xf32, #tpu.memory_space<vmem>> -> memref<1x128xf32, #tpu.memory_space<vmem>>
    %143 = tpu.memref_slice %arg7[%c7_i32_92] : memref<16x!tpu.dma_semaphore, #tpu.memory_space<semaphore_mem>> -> memref<1x!tpu.dma_semaphore, #tpu.memory_space<semaphore_mem>>
    %144 = tpu.memref_squeeze %143 : memref<1x!tpu.dma_semaphore, #tpu.memory_space<semaphore_mem>> -> memref<!tpu.dma_semaphore, #tpu.memory_space<semaphore_mem>>
    tpu.wait_dma2 semaphore(%144 : memref<!tpu.dma_semaphore, #tpu.memory_space<semaphore_mem>>) src(%141 : memref<1x128xf32, #tpu.memory_space<any>>) dst(%142 : memref<1x128xf32, #tpu.memory_space<vmem>>)
    %c8_i32_96 = arith.constant 8 : i32
    %c0_i32_97 = arith.constant 0 : i32
    %145 = tpu.memref_slice %arg2[%59, %c0_i32_97] : memref<64x128xf32, #tpu.memory_space<any>> -> memref<1x128xf32, #tpu.memory_space<any>>
    %c8_i32_98 = arith.constant 8 : i32
    %c0_i32_99 = arith.constant 0 : i32
    %146 = tpu.memref_slice %arg6[%c8_i32_98, %c0_i32_99] : memref<16x128xf32, #tpu.memory_space<vmem>> -> memref<1x128xf32, #tpu.memory_space<vmem>>
    %147 = tpu.memref_slice %arg7[%c8_i32_96] : memref<16x!tpu.dma_semaphore, #tpu.memory_space<semaphore_mem>> -> memref<1x!tpu.dma_semaphore, #tpu.memory_space<semaphore_mem>>
    %148 = tpu.memref_squeeze %147 : memref<1x!tpu.dma_semaphore, #tpu.memory_space<semaphore_mem>> -> memref<!tpu.dma_semaphore, #tpu.memory_space<semaphore_mem>>
    tpu.wait_dma2 semaphore(%148 : memref<!tpu.dma_semaphore, #tpu.memory_space<semaphore_mem>>) src(%145 : memref<1x128xf32, #tpu.memory_space<any>>) dst(%146 : memref<1x128xf32, #tpu.memory_space<vmem>>)
    %c9_i32_100 = arith.constant 9 : i32
    %c0_i32_101 = arith.constant 0 : i32
    %149 = tpu.memref_slice %arg2[%66, %c0_i32_101] : memref<64x128xf32, #tpu.memory_space<any>> -> memref<1x128xf32, #tpu.memory_space<any>>
    %c9_i32_102 = arith.constant 9 : i32
    %c0_i32_103 = arith.constant 0 : i32
    %150 = tpu.memref_slice %arg6[%c9_i32_102, %c0_i32_103] : memref<16x128xf32, #tpu.memory_space<vmem>> -> memref<1x128xf32, #tpu.memory_space<vmem>>
    %151 = tpu.memref_slice %arg7[%c9_i32_100] : memref<16x!tpu.dma_semaphore, #tpu.memory_space<semaphore_mem>> -> memref<1x!tpu.dma_semaphore, #tpu.memory_space<semaphore_mem>>
    %152 = tpu.memref_squeeze %151 : memref<1x!tpu.dma_semaphore, #tpu.memory_space<semaphore_mem>> -> memref<!tpu.dma_semaphore, #tpu.memory_space<semaphore_mem>>
    tpu.wait_dma2 semaphore(%152 : memref<!tpu.dma_semaphore, #tpu.memory_space<semaphore_mem>>) src(%149 : memref<1x128xf32, #tpu.memory_space<any>>) dst(%150 : memref<1x128xf32, #tpu.memory_space<vmem>>)
    %c10_i32_104 = arith.constant 10 : i32
    %c0_i32_105 = arith.constant 0 : i32
    %153 = tpu.memref_slice %arg2[%73, %c0_i32_105] : memref<64x128xf32, #tpu.memory_space<any>> -> memref<1x128xf32, #tpu.memory_space<any>>
    %c10_i32_106 = arith.constant 10 : i32
    %c0_i32_107 = arith.constant 0 : i32
    %154 = tpu.memref_slice %arg6[%c10_i32_106, %c0_i32_107] : memref<16x128xf32, #tpu.memory_space<vmem>> -> memref<1x128xf32, #tpu.memory_space<vmem>>
    %155 = tpu.memref_slice %arg7[%c10_i32_104] : memref<16x!tpu.dma_semaphore, #tpu.memory_space<semaphore_mem>> -> memref<1x!tpu.dma_semaphore, #tpu.memory_space<semaphore_mem>>
    %156 = tpu.memref_squeeze %155 : memref<1x!tpu.dma_semaphore, #tpu.memory_space<semaphore_mem>> -> memref<!tpu.dma_semaphore, #tpu.memory_space<semaphore_mem>>
    tpu.wait_dma2 semaphore(%156 : memref<!tpu.dma_semaphore, #tpu.memory_space<semaphore_mem>>) src(%153 : memref<1x128xf32, #tpu.memory_space<any>>) dst(%154 : memref<1x128xf32, #tpu.memory_space<vmem>>)
    %c11_i32_108 = arith.constant 11 : i32
    %c0_i32_109 = arith.constant 0 : i32
    %157 = tpu.memref_slice %arg2[%80, %c0_i32_109] : memref<64x128xf32, #tpu.memory_space<any>> -> memref<1x128xf32, #tpu.memory_space<any>>
    %c11_i32_110 = arith.constant 11 : i32
    %c0_i32_111 = arith.constant 0 : i32
    %158 = tpu.memref_slice %arg6[%c11_i32_110, %c0_i32_111] : memref<16x128xf32, #tpu.memory_space<vmem>> -> memref<1x128xf32, #tpu.memory_space<vmem>>
    %159 = tpu.memref_slice %arg7[%c11_i32_108] : memref<16x!tpu.dma_semaphore, #tpu.memory_space<semaphore_mem>> -> memref<1x!tpu.dma_semaphore, #tpu.memory_space<semaphore_mem>>
    %160 = tpu.memref_squeeze %159 : memref<1x!tpu.dma_semaphore, #tpu.memory_space<semaphore_mem>> -> memref<!tpu.dma_semaphore, #tpu.memory_space<semaphore_mem>>
    tpu.wait_dma2 semaphore(%160 : memref<!tpu.dma_semaphore, #tpu.memory_space<semaphore_mem>>) src(%157 : memref<1x128xf32, #tpu.memory_space<any>>) dst(%158 : memref<1x128xf32, #tpu.memory_space<vmem>>)
    %c12_i32_112 = arith.constant 12 : i32
    %c0_i32_113 = arith.constant 0 : i32
    %161 = tpu.memref_slice %arg2[%87, %c0_i32_113] : memref<64x128xf32, #tpu.memory_space<any>> -> memref<1x128xf32, #tpu.memory_space<any>>
    %c12_i32_114 = arith.constant 12 : i32
    %c0_i32_115 = arith.constant 0 : i32
    %162 = tpu.memref_slice %arg6[%c12_i32_114, %c0_i32_115] : memref<16x128xf32, #tpu.memory_space<vmem>> -> memref<1x128xf32, #tpu.memory_space<vmem>>
    %163 = tpu.memref_slice %arg7[%c12_i32_112] : memref<16x!tpu.dma_semaphore, #tpu.memory_space<semaphore_mem>> -> memref<1x!tpu.dma_semaphore, #tpu.memory_space<semaphore_mem>>
    %164 = tpu.memref_squeeze %163 : memref<1x!tpu.dma_semaphore, #tpu.memory_space<semaphore_mem>> -> memref<!tpu.dma_semaphore, #tpu.memory_space<semaphore_mem>>
    tpu.wait_dma2 semaphore(%164 : memref<!tpu.dma_semaphore, #tpu.memory_space<semaphore_mem>>) src(%161 : memref<1x128xf32, #tpu.memory_space<any>>) dst(%162 : memref<1x128xf32, #tpu.memory_space<vmem>>)
    %c13_i32_116 = arith.constant 13 : i32
    %c0_i32_117 = arith.constant 0 : i32
    %165 = tpu.memref_slice %arg2[%94, %c0_i32_117] : memref<64x128xf32, #tpu.memory_space<any>> -> memref<1x128xf32, #tpu.memory_space<any>>
    %c13_i32_118 = arith.constant 13 : i32
    %c0_i32_119 = arith.constant 0 : i32
    %166 = tpu.memref_slice %arg6[%c13_i32_118, %c0_i32_119] : memref<16x128xf32, #tpu.memory_space<vmem>> -> memref<1x128xf32, #tpu.memory_space<vmem>>
    %167 = tpu.memref_slice %arg7[%c13_i32_116] : memref<16x!tpu.dma_semaphore, #tpu.memory_space<semaphore_mem>> -> memref<1x!tpu.dma_semaphore, #tpu.memory_space<semaphore_mem>>
    %168 = tpu.memref_squeeze %167 : memref<1x!tpu.dma_semaphore, #tpu.memory_space<semaphore_mem>> -> memref<!tpu.dma_semaphore, #tpu.memory_space<semaphore_mem>>
    tpu.wait_dma2 semaphore(%168 : memref<!tpu.dma_semaphore, #tpu.memory_space<semaphore_mem>>) src(%165 : memref<1x128xf32, #tpu.memory_space<any>>) dst(%166 : memref<1x128xf32, #tpu.memory_space<vmem>>)
    %c14_i32_120 = arith.constant 14 : i32
    %c0_i32_121 = arith.constant 0 : i32
    %169 = tpu.memref_slice %arg2[%101, %c0_i32_121] : memref<64x128xf32, #tpu.memory_space<any>> -> memref<1x128xf32, #tpu.memory_space<any>>
    %c14_i32_122 = arith.constant 14 : i32
    %c0_i32_123 = arith.constant 0 : i32
    %170 = tpu.memref_slice %arg6[%c14_i32_122, %c0_i32_123] : memref<16x128xf32, #tpu.memory_space<vmem>> -> memref<1x128xf32, #tpu.memory_space<vmem>>
    %171 = tpu.memref_slice %arg7[%c14_i32_120] : memref<16x!tpu.dma_semaphore, #tpu.memory_space<semaphore_mem>> -> memref<1x!tpu.dma_semaphore, #tpu.memory_space<semaphore_mem>>
    %172 = tpu.memref_squeeze %171 : memref<1x!tpu.dma_semaphore, #tpu.memory_space<semaphore_mem>> -> memref<!tpu.dma_semaphore, #tpu.memory_space<semaphore_mem>>
    tpu.wait_dma2 semaphore(%172 : memref<!tpu.dma_semaphore, #tpu.memory_space<semaphore_mem>>) src(%169 : memref<1x128xf32, #tpu.memory_space<any>>) dst(%170 : memref<1x128xf32, #tpu.memory_space<vmem>>)
    %c15_i32_124 = arith.constant 15 : i32
    %c0_i32_125 = arith.constant 0 : i32
    %173 = tpu.memref_slice %arg2[%108, %c0_i32_125] : memref<64x128xf32, #tpu.memory_space<any>> -> memref<1x128xf32, #tpu.memory_space<any>>
    %c15_i32_126 = arith.constant 15 : i32
    %c0_i32_127 = arith.constant 0 : i32
    %174 = tpu.memref_slice %arg6[%c15_i32_126, %c0_i32_127] : memref<16x128xf32, #tpu.memory_space<vmem>> -> memref<1x128xf32, #tpu.memory_space<vmem>>
    %175 = tpu.memref_slice %arg7[%c15_i32_124] : memref<16x!tpu.dma_semaphore, #tpu.memory_space<semaphore_mem>> -> memref<1x!tpu.dma_semaphore, #tpu.memory_space<semaphore_mem>>
    %176 = tpu.memref_squeeze %175 : memref<1x!tpu.dma_semaphore, #tpu.memory_space<semaphore_mem>> -> memref<!tpu.dma_semaphore, #tpu.memory_space<semaphore_mem>>
    tpu.wait_dma2 semaphore(%176 : memref<!tpu.dma_semaphore, #tpu.memory_space<semaphore_mem>>) src(%173 : memref<1x128xf32, #tpu.memory_space<any>>) dst(%174 : memref<1x128xf32, #tpu.memory_space<vmem>>)
    %c0 = arith.constant 0 : index
    %c0_128 = arith.constant 0 : index
    %177 = vector.load %arg6[%c0, %c0_128] : memref<16x128xf32, #tpu.memory_space<vmem>>, vector<16x128xf32>
    %c0_129 = arith.constant 0 : index
    %c0_130 = arith.constant 0 : index
    %178 = vector.load %arg3[%c0_129, %c0_130] : memref<16x128xf32, #tpu.memory_space<vmem>>, vector<16x128xf32>
    %179 = arith.addf %177, %178 : vector<16x128xf32>
    %cst = arith.constant dense<0.000000e+00> : vector<16xf32>
    %180 = vector.multi_reduction <add>, %179, %cst [1] : vector<16x128xf32> to vector<16xf32>
    %181 = vector.shape_cast %180 : vector<16xf32> to vector<16x1xf32>
    %cst_131 = arith.constant 1.280000e+02 : f32
    %182 = vector.broadcast %cst_131 : f32 to vector<16x1xf32>
    %183 = arith.divf %181, %182 : vector<16x1xf32>
    %184 = vector.broadcast %183 : vector<16x1xf32> to vector<16x128xf32>
    %185 = arith.subf %179, %184 : vector<16x128xf32>
    %186 = arith.mulf %185, %185 : vector<16x128xf32>
    %cst_132 = arith.constant dense<0.000000e+00> : vector<16xf32>
    %187 = vector.multi_reduction <add>, %186, %cst_132 [1] : vector<16x128xf32> to vector<16xf32>
    %188 = vector.shape_cast %187 : vector<16xf32> to vector<16x1xf32>
    %cst_133 = arith.constant 1.280000e+02 : f32
    %189 = vector.broadcast %cst_133 : f32 to vector<16x1xf32>
    %190 = arith.divf %188, %189 : vector<16x1xf32>
    %cst_134 = arith.constant 9.99999974E-6 : f32
    %191 = vector.broadcast %cst_134 : f32 to vector<16x1xf32>
    %192 = arith.addf %190, %191 : vector<16x1xf32>
    %193 = math.rsqrt %192 : vector<16x1xf32>
    %c0_135 = arith.constant 0 : index
    %c0_136 = arith.constant 0 : index
    %194 = vector.load %arg4[%c0_135, %c0_136] : memref<2x128xf32, #tpu.memory_space<vmem>>, vector<1x128xf32>
    %c1 = arith.constant 1 : index
    %c0_137 = arith.constant 0 : index
    %195 = vector.load %arg4[%c1, %c0_137] : memref<2x128xf32, #tpu.memory_space<vmem>>, vector<1x128xf32>
    %196 = vector.broadcast %193 : vector<16x1xf32> to vector<16x128xf32>
    %197 = arith.mulf %185, %196 : vector<16x128xf32>
    %198 = vector.broadcast %194 : vector<1x128xf32> to vector<16x128xf32>
    %199 = arith.mulf %197, %198 : vector<16x128xf32>
    %200 = vector.broadcast %195 : vector<1x128xf32> to vector<16x128xf32>
    %201 = arith.addf %199, %200 : vector<16x128xf32>
    %c0_138 = arith.constant 0 : index
    %c0_139 = arith.constant 0 : index
    %202 = vector.load %arg5[%c0_138, %c0_139] : memref<16x128xf32, #tpu.memory_space<vmem>>, vector<16x128xf32>
    tpu.vector_store %arg5[%c0_138, %c0_139], %201 {strides = array<i32>} : memref<16x128xf32, #tpu.memory_space<vmem>>, vector<16x128xf32>,
    return
  }
  func.func @transform_1(%arg0: i32, %arg1: memref<16xi32, #tpu.memory_space<smem>>) -> (i32, i32) {
    %c0_i32 = arith.constant 0 : i32
    %c0_i32_0 = arith.constant 0 : i32
    %c0_i32_1 = arith.constant 0 : i32
    return %c0_i32, %c0_i32_0 : i32, i32
  }
  func.func @transform_2(%arg0: i32, %arg1: memref<16xi32, #tpu.memory_space<smem>>) -> (i32, i32) {
    %c0_i32 = arith.constant 0 : i32
    %c0_i32_0 = arith.constant 0 : i32
    %c0_i32_1 = arith.constant 0 : i32
    return %c0_i32, %c0_i32_0 : i32, i32
  }
  func.func @transform_3(%arg0: i32, %arg1: memref<16xi32, #tpu.memory_space<smem>>) -> (i32, i32) {
    %c0_i32 = arith.constant 0 : i32
    %c0_i32_0 = arith.constant 0 : i32
    return %arg0, %c0_i32 : i32, i32
  }
}

</mosaic_0001>

<llo_original>
// kernel: tpu_custom_call.1
$region0: #{tpu_custom_call.1}
  #allocation0 [shape = 'u32[]', space=smem, size = 0x4, offset = 0x4, fixed_abs, tag = 'smem constant byte address 0x4 - core index']
  #allocation1 [shape = 'u32[144,128]{1,0:T(1,128)}', space=vmem, size = 0x12000, scoped, tag = 'internal scratch']
  #allocation2 [shape = 'f32[16,128]{1,0:T(8,128)}', space=vmem, size = 0x2000, scoped, tag = 'scratch operand']
  #allocation3 [shape = 's32[16]{0}', space=sflag, size = 0x40, scoped, tag = 'scratch operand']
  #allocation4 [shape = 's32[1]{0}', space=sflag, size = 0x4, scoped, tag = 'scoped memory for tpu_custom_call.1']
  #allocation5 [shape = 'u8[512]{0}', space=smem, size = 0x200, scoped, tag = 'prefetched SMEM operand 0']
  #allocation10 [shape = 's32[]', space=sflag, size = 0x4, offset = 0, fixed_abs, tag = 'sflag constant byte address 0x0 - dummy sync flag']
  #allocation11 [shape = 's32[]', space=sflag, size = 0x4, offset = 0, fixed_abs, tag = 'sflag constant byte address 0x0 - dummy sync flag']
  #allocation12 [shape = 'u32[]', space=smem, size = 0x4, offset = 0x44, fixed_abs, tag = 'smem constant byte address 0x44 - assertion arg 0']
  #allocation13 [shape = 'u32[]', space=smem, size = 0x4, offset = 0x48, fixed_abs, tag = 'smem constant byte address 0x48 - assertion arg 1']
  #allocation14 [shape = 's32[]', space=sflag, size = 0x4, offset = 0, fixed_abs, tag = 'sflag constant byte address 0x0 - dummy sync flag']
  #allocation15 [shape = 's32[]', space=sflag, size = 0x4, offset = 0, fixed_abs, tag = 'sflag constant byte address 0x0 - dummy sync flag']
  #allocation16 [shape = 's32[]', space=sflag, size = 0x4, offset = 0, fixed_abs, tag = 'sflag constant byte address 0x0 - dummy sync flag']
  #allocation17 [shape = 's32[]', space=sflag, size = 0x4, offset = 0, fixed_abs, tag = 'sflag constant byte address 0x0 - dummy sync flag']
  #allocation18 [shape = 's32[]', space=sflag, size = 0x4, offset = 0, fixed_abs, tag = 'sflag constant byte address 0x0 - dummy sync flag']
  #allocation19 [shape = 's32[]', space=sflag, size = 0x4, offset = 0, fixed_abs, tag = 'sflag constant byte address 0x0 - dummy sync flag']
  #allocation20 [shape = 's32[]', space=sflag, size = 0x4, offset = 0, fixed_abs, tag = 'sflag constant byte address 0x0 - dummy sync flag']
  #allocation21 [shape = 's32[]', space=sflag, size = 0x4, offset = 0, fixed_abs, tag = 'sflag constant byte address 0x0 - dummy sync flag']
  #allocation22 [shape = 's32[]', space=sflag, size = 0x4, offset = 0, fixed_abs, tag = 'sflag constant byte address 0x0 - dummy sync flag']
  #allocation23 [shape = 's32[]', space=sflag, size = 0x4, offset = 0, fixed_abs, tag = 'sflag constant byte address 0x0 - dummy sync flag']
  #allocation24 [shape = 's32[]', space=sflag, size = 0x4, offset = 0, fixed_abs, tag = 'sflag constant byte address 0x0 - dummy sync flag']
  #allocation25 [shape = 's32[]', space=sflag, size = 0x4, offset = 0, fixed_abs, tag = 'sflag constant byte address 0x0 - dummy sync flag']
  #allocation26 [shape = 's32[]', space=sflag, size = 0x4, offset = 0, fixed_abs, tag = 'sflag constant byte address 0x0 - dummy sync flag']
  #allocation27 [shape = 's32[]', space=sflag, size = 0x4, offset = 0, fixed_abs, tag = 'sflag constant byte address 0x0 - dummy sync flag']
  #allocation28 [shape = 's32[]', space=sflag, size = 0x4, offset = 0, fixed_abs, tag = 'sflag constant byte address 0x0 - dummy sync flag']
  #allocation29 [shape = 's32[]', space=sflag, size = 0x4, offset = 0, fixed_abs, tag = 'sflag constant byte address 0x0 - dummy sync flag']
  #allocation30 [shape = 's32[]', space=sflag, size = 0x4, offset = 0, fixed_abs, tag = 'sflag constant byte address 0x0 - dummy sync flag']
  #allocation31 [shape = 's32[]', space=sflag, size = 0x4, offset = 0, fixed_abs, tag = 'sflag constant byte address 0x0 - dummy sync flag']
  #allocation32 [shape = 's32[]', space=sflag, size = 0x4, offset = 0, fixed_abs, tag = 'sflag constant byte address 0x0 - dummy sync flag']
  #allocation33 [shape = 's32[]', space=sflag, size = 0x4, offset = 0, fixed_abs, tag = 'sflag constant byte address 0x0 - dummy sync flag']
  #allocation34 [shape = 's32[]', space=sflag, size = 0x4, offset = 0, fixed_abs, tag = 'sflag constant byte address 0x0 - dummy sync flag']
  #allocation35 [shape = 's32[]', space=sflag, size = 0x4, offset = 0, fixed_abs, tag = 'sflag constant byte address 0x0 - dummy sync flag']
  #allocation36 [shape = 's32[]', space=sflag, size = 0x4, offset = 0, fixed_abs, tag = 'sflag constant byte address 0x0 - dummy sync flag']
  #allocation37 [shape = 's32[]', space=sflag, size = 0x4, offset = 0, fixed_abs, tag = 'sflag constant byte address 0x0 - dummy sync flag']
  #allocation38 [shape = 's32[]', space=sflag, size = 0x4, offset = 0, fixed_abs, tag = 'sflag constant byte address 0x0 - dummy sync flag']
  #allocation39 [shape = 's32[]', space=sflag, size = 0x4, offset = 0, fixed_abs, tag = 'sflag constant byte address 0x0 - dummy sync flag']
  #allocation40 [shape = 's32[]', space=sflag, size = 0x4, offset = 0, fixed_abs, tag = 'sflag constant byte address 0x0 - dummy sync flag']
  #allocation41 [shape = 's32[]', space=sflag, size = 0x4, offset = 0, fixed_abs, tag = 'sflag constant byte address 0x0 - dummy sync flag']
  #allocation42 [shape = 's32[]', space=sflag, size = 0x4, offset = 0, fixed_abs, tag = 'sflag constant byte address 0x0 - dummy sync flag']
  #allocation43 [shape = 's32[]', space=sflag, size = 0x4, offset = 0, fixed_abs, tag = 'sflag constant byte address 0x0 - dummy sync flag']
  %s0 = inlined_call_operand.hbm [shape: s32[16], index: 0, kind: input, shape index: {}]
  %s1 = inlined_call_operand.hbm [shape: f32[64,128], index: 1, kind: input, shape index: {}]
  %s2 = inlined_call_operand.hbm [shape: f32[16,128], index: 2, kind: input, shape index: {}]
  %s3 = inlined_call_operand.vmem [shape: f32[2,128], index: 3, kind: input, shape index: {}]
  %s4 = inlined_call_operand.hbm [shape: f32[16,128], index: 4, kind: output, shape index: {}]
  %s5 = sld [smem:[#allocation0]]
  $region86: #{tpu_custom_call.1} parent=0
    _
  %s7 = ssub.s32 1, %s5
  %s8 = scalar_select 0, %s7, %s5
  %10 = dma.hbm_to_smem %s0, 16, [#allocation5], [#allocation4]
  %11 = dma.done [#allocation4], 16
  %12 = sfence
  $region1: #{tpu_custom_call.1} parent=0
    #allocation6 [shape = 'u8[8192]{0}', space=vmem, size = 0x2000, scoped, tag = 'input window, operand 2, single buffered']
    #allocation7 [shape = 's32[1]{0}', space=sflag, size = 0x4, scoped, tag = 'scoped memory for tpu_custom_call.1']
    #allocation8 [shape = 's32[1]{0}', space=sflag, size = 0x4, scoped, tag = 'scoped memory for tpu_custom_call.1']
    #allocation9 [shape = 'u8[8192]{0}', space=vmem, size = 0x2000, scoped, tag = 'output window, operand 0, single buffered']
    %13 = vsyncpa [#allocation7], 0
    %14 = vsyncpa [#allocation8], 0
    // Predicated region
    $region2: #{tpu_custom_call.1} parent=1 // pred_check
      _
    $region3: #{tpu_custom_call.1} parent=1 // pred_check_branch
      %16 = sbr.rel (0) target = $region5
    $region4: #{tpu_custom_call.1} parent=1 // pred_region
      %s18 = ssub.s32 256, 256
      %19 = vsyncadd [#allocation7], %s18
      %s20 = sshll.u32 [#allocation6], 4
      %s21 = int_to_ptr.vmem [resolvable:$true] %s20
      %26 = dma.hbm_to_vmem [thread:$0]  %s2, 256, %s21, [#allocation7], 128, 128, 8
    $region5: #{tpu_custom_call.1} parent=1 // pred_fallthru
      _
    // Predicated region
    $region6: #{tpu_custom_call.1} parent=1 // pred_check
      _
    $region7: #{tpu_custom_call.1} parent=1 // pred_check_branch
      %28 = sbr.rel (0) target = $region9
    $region8: #{tpu_custom_call.1} parent=1 // pred_region
      _
    $region9: #{tpu_custom_call.1} parent=1 // pred_fallthru
      _
    // Predicated region
    $region10: #{tpu_custom_call.1} parent=1 // pred_check
      _
    $region11: #{tpu_custom_call.1} parent=1 // pred_check_branch
      %30 = sbr.rel (0) target = $region13
    $region12: #{tpu_custom_call.1} parent=1 // pred_region
      %31 = dma.done [#allocation7], 256
    $region13: #{tpu_custom_call.1} parent=1 // pred_fallthru
      _
    %s32 = smul.u32 0, 16
    %s33 = sld [smem:[#allocation5 + %s32]]
    %s34 = smul.addr %s33, 16
    %s35 = scalar_lea.hbm %s1, %s34
    // Predicated region
    $region14: #{tpu_custom_call.1} parent=1 // pred_check
      _
    $region15: #{tpu_custom_call.1} parent=1 // pred_check_branch
      %37 = sbr.rel target = $region17
    $region16: #{tpu_custom_call.1} parent=1 // pred_region
      %38 = sst [smem:[#allocation12]] [#allocation11]
      %39 = sst [smem:[#allocation13]] [#allocation10]
    $region17: #{tpu_custom_call.1} parent=1 // pred_fallthru
      _
    %41 = shalt.err (0)
    %s43 = sshll.u32 [#allocation2], 4
    %s44 = int_to_ptr.vmem [resolvable:$true] %s43
    %46 = dma.hbm_to_vmem [thread:$0]  %s35, 16, %s44, [#allocation3]
    %s47 = sadd.s32 %s32, 1
    %s48 = sld [smem:[#allocation5 + %s47]]
    %s49 = smul.addr %s48, 16
    %s50 = scalar_lea.hbm %s1, %s49
    %s51 = scalar_lea.vmem [#allocation2], 1
    %s52 = scalar_lea.sflag [#allocation3], 1
    // Predicated region
    $region18: #{tpu_custom_call.1} parent=1 // pred_check
      _
    $region19: #{tpu_custom_call.1} parent=1 // pred_check_branch
      %54 = sbr.rel target = $region21
    $region20: #{tpu_custom_call.1} parent=1 // pred_region
      %55 = sst [smem:[#allocation12]] [#allocation15]
      %56 = sst [smem:[#allocation13]] [#allocation14]
    $region21: #{tpu_custom_call.1} parent=1 // pred_fallthru
      _
    %58 = shalt.err (0)
    %s60 = sshll.u32 %s51, 4
    %s61 = int_to_ptr.vmem [resolvable:$true] %s60
    %63 = dma.hbm_to_vmem [thread:$0]  %s50, 16, %s61, %s52
    %s64 = sadd.s32 %s32, 2
    %s65 = sld [smem:[#allocation5 + %s64]]
    %s66 = smul.addr %s65, 16
    %s67 = scalar_lea.hbm %s1, %s66
    %s68 = scalar_lea.vmem [#allocation2], 2
    %s69 = scalar_lea.sflag [#allocation3], 2
    // Predicated region
    $region22: #{tpu_custom_call.1} parent=1 // pred_check
      _
    $region23: #{tpu_custom_call.1} parent=1 // pred_check_branch
      %71 = sbr.rel target = $region25
    $region24: #{tpu_custom_call.1} parent=1 // pred_region
      %72 = sst [smem:[#allocation12]] [#allocation17]
      %73 = sst [smem:[#allocation13]] [#allocation16]
    $region25: #{tpu_custom_call.1} parent=1 // pred_fallthru
      _
    %75 = shalt.err (0)
    %s77 = sshll.u32 %s68, 4
    %s78 = int_to_ptr.vmem [resolvable:$true] %s77
    %80 = dma.hbm_to_vmem [thread:$0]  %s67, 16, %s78, %s69
    %s81 = sadd.s32 %s32, 3
    %s82 = sld [smem:[#allocation5 + %s81]]
    %s83 = smul.addr %s82, 16
    %s84 = scalar_lea.hbm %s1, %s83
    %s85 = scalar_lea.vmem [#allocation2], 3
    %s86 = scalar_lea.sflag [#allocation3], 3
    // Predicated region
    $region26: #{tpu_custom_call.1} parent=1 // pred_check
      _
    $region27: #{tpu_custom_call.1} parent=1 // pred_check_branch
      %88 = sbr.rel target = $region29
    $region28: #{tpu_custom_call.1} parent=1 // pred_region
      %89 = sst [smem:[#allocation12]] [#allocation19]
      %90 = sst [smem:[#allocation13]] [#allocation18]
    $region29: #{tpu_custom_call.1} parent=1 // pred_fallthru
      _
    %92 = shalt.err (0)
    %s94 = sshll.u32 %s85, 4
    %s95 = int_to_ptr.vmem [resolvable:$true] %s94
    %97 = dma.hbm_to_vmem [thread:$0]  %s84, 16, %s95, %s86
    %s98 = sadd.s32 %s32, 4
    %s99 = sld [smem:[#allocation5 + %s98]]
    %s100 = smul.addr %s99, 16
    %s101 = scalar_lea.hbm %s1, %s100
    %s102 = scalar_lea.vmem [#allocation2], 4
    %s103 = scalar_lea.sflag [#allocation3], 4
    // Predicated region
    $region30: #{tpu_custom_call.1} parent=1 // pred_check
      _
    $region31: #{tpu_custom_call.1} parent=1 // pred_check_branch
      %105 = sbr.rel target = $region33
    $region32: #{tpu_custom_call.1} parent=1 // pred_region
      %106 = sst [smem:[#allocation12]] [#allocation21]
      %107 = sst [smem:[#allocation13]] [#allocation20]
    $region33: #{tpu_custom_call.1} parent=1 // pred_fallthru
      _
    %109 = shalt.err (0)
    %s111 = sshll.u32 %s102, 4
    %s112 = int_to_ptr.vmem [resolvable:$true] %s111
    %114 = dma.hbm_to_vmem [thread:$0]  %s101, 16, %s112, %s103
    %s115 = sadd.s32 %s32, 5
    %s116 = sld [smem:[#allocation5 + %s115]]
    %s117 = smul.addr %s116, 16
    %s118 = scalar_lea.hbm %s1, %s117
    %s119 = scalar_lea.vmem [#allocation2], 5
    %s120 = scalar_lea.sflag [#allocation3], 5
    // Predicated region
    $region34: #{tpu_custom_call.1} parent=1 // pred_check
      _
    $region35: #{tpu_custom_call.1} parent=1 // pred_check_branch
      %122 = sbr.rel target = $region37
    $region36: #{tpu_custom_call.1} parent=1 // pred_region
      %123 = sst [smem:[#allocation12]] [#allocation23]
      %124 = sst [smem:[#allocation13]] [#allocation22]
    $region37: #{tpu_custom_call.1} parent=1 // pred_fallthru
      _
    %126 = shalt.err (0)
    %s128 = sshll.u32 %s119, 4
    %s129 = int_to_ptr.vmem [resolvable:$true] %s128
    %131 = dma.hbm_to_vmem [thread:$0]  %s118, 16, %s129, %s120
    %s132 = sadd.s32 %s32, 6
    %s133 = sld [smem:[#allocation5 + %s132]]
    %s134 = smul.addr %s133, 16
    %s135 = scalar_lea.hbm %s1, %s134
    %s136 = scalar_lea.vmem [#allocation2], 6
    %s137 = scalar_lea.sflag [#allocation3], 6
    // Predicated region
    $region38: #{tpu_custom_call.1} parent=1 // pred_check
      _
    $region39: #{tpu_custom_call.1} parent=1 // pred_check_branch
      %139 = sbr.rel target = $region41
    $region40: #{tpu_custom_call.1} parent=1 // pred_region
      %140 = sst [smem:[#allocation12]] [#allocation25]
      %141 = sst [smem:[#allocation13]] [#allocation24]
    $region41: #{tpu_custom_call.1} parent=1 // pred_fallthru
      _
    %143 = shalt.err (0)
    %s145 = sshll.u32 %s136, 4
    %s146 = int_to_ptr.vmem [resolvable:$true] %s145
    %148 = dma.hbm_to_vmem [thread:$0]  %s135, 16, %s146, %s137
    %s149 = sadd.s32 %s32, 7
    %s150 = sld [smem:[#allocation5 + %s149]]
    %s151 = smul.addr %s150, 16
    %s152 = scalar_lea.hbm %s1, %s151
    %s153 = scalar_lea.vmem [#allocation2], 7
    %s154 = scalar_lea.sflag [#allocation3], 7
    // Predicated region
    $region42: #{tpu_custom_call.1} parent=1 // pred_check
      _
    $region43: #{tpu_custom_call.1} parent=1 // pred_check_branch
      %156 = sbr.rel target = $region45
    $region44: #{tpu_custom_call.1} parent=1 // pred_region
      %157 = sst [smem:[#allocation12]] [#allocation27]
      %158 = sst [smem:[#allocation13]] [#allocation26]
    $region45: #{tpu_custom_call.1} parent=1 // pred_fallthru
      _
    %160 = shalt.err (0)
    %s162 = sshll.u32 %s153, 4
    %s163 = int_to_ptr.vmem [resolvable:$true] %s162
    %165 = dma.hbm_to_vmem [thread:$0]  %s152, 16, %s163, %s154
    %s166 = sadd.s32 %s32, 8
    %s167 = sld [smem:[#allocation5 + %s166]]
    %s168 = smul.addr %s167, 16
    %s169 = scalar_lea.hbm %s1, %s168
    %s170 = scalar_lea.vmem [#allocation2], 8
    %s171 = scalar_lea.sflag [#allocation3], 8
    // Predicated region
    $region46: #{tpu_custom_call.1} parent=1 // pred_check
      _
    $region47: #{tpu_custom_call.1} parent=1 // pred_check_branch
      %173 = sbr.rel target = $region49
    $region48: #{tpu_custom_call.1} parent=1 // pred_region
      %174 = sst [smem:[#allocation12]] [#allocation29]
      %175 = sst [smem:[#allocation13]] [#allocation28]
    $region49: #{tpu_custom_call.1} parent=1 // pred_fallthru
      _
    %177 = shalt.err (0)
    %s179 = sshll.u32 %s170, 4
    %s180 = int_to_ptr.vmem [resolvable:$true] %s179
    %182 = dma.hbm_to_vmem [thread:$0]  %s169, 16, %s180, %s171
    %s183 = sadd.s32 %s32, 9
    %s184 = sld [smem:[#allocation5 + %s183]]
    %s185 = smul.addr %s184, 16
    %s186 = scalar_lea.hbm %s1, %s185
    %s187 = scalar_lea.vmem [#allocation2], 9
    %s188 = scalar_lea.sflag [#allocation3], 9
    // Predicated region
    $region50: #{tpu_custom_call.1} parent=1 // pred_check
      _
    $region51: #{tpu_custom_call.1} parent=1 // pred_check_branch
      %190 = sbr.rel target = $region53
    $region52: #{tpu_custom_call.1} parent=1 // pred_region
      %191 = sst [smem:[#allocation12]] [#allocation31]
      %192 = sst [smem:[#allocation13]] [#allocation30]
    $region53: #{tpu_custom_call.1} parent=1 // pred_fallthru
      _
    %194 = shalt.err (0)
    %s196 = sshll.u32 %s187, 4
    %s197 = int_to_ptr.vmem [resolvable:$true] %s196
    %199 = dma.hbm_to_vmem [thread:$0]  %s186, 16, %s197, %s188
    %s200 = sadd.s32 %s32, 10
    %s201 = sld [smem:[#allocation5 + %s200]]
    %s202 = smul.addr %s201, 16
    %s203 = scalar_lea.hbm %s1, %s202
    %s204 = scalar_lea.vmem [#allocation2], 10
    %s205 = scalar_lea.sflag [#allocation3], 10
    // Predicated region
    $region54: #{tpu_custom_call.1} parent=1 // pred_check
      _
    $region55: #{tpu_custom_call.1} parent=1 // pred_check_branch
      %207 = sbr.rel target = $region57
    $region56: #{tpu_custom_call.1} parent=1 // pred_region
      %208 = sst [smem:[#allocation12]] [#allocation33]
      %209 = sst [smem:[#allocation13]] [#allocation32]
    $region57: #{tpu_custom_call.1} parent=1 // pred_fallthru
      _
    %211 = shalt.err (0)
    %s213 = sshll.u32 %s204, 4
    %s214 = int_to_ptr.vmem [resolvable:$true] %s213
    %216 = dma.hbm_to_vmem [thread:$0]  %s203, 16, %s214, %s205
    %s217 = sadd.s32 %s32, 11
    %s218 = sld [smem:[#allocation5 + %s217]]
    %s219 = smul.addr %s218, 16
    %s220 = scalar_lea.hbm %s1, %s219
    %s221 = scalar_lea.vmem [#allocation2], 11
    %s222 = scalar_lea.sflag [#allocation3], 11
    // Predicated region
    $region58: #{tpu_custom_call.1} parent=1 // pred_check
      _
    $region59: #{tpu_custom_call.1} parent=1 // pred_check_branch
      %224 = sbr.rel target = $region61
    $region60: #{tpu_custom_call.1} parent=1 // pred_region
      %225 = sst [smem:[#allocation12]] [#allocation35]
      %226 = sst [smem:[#allocation13]] [#allocation34]
    $region61: #{tpu_custom_call.1} parent=1 // pred_fallthru
      _
    %228 = shalt.err (0)
    %s230 = sshll.u32 %s221, 4
    %s231 = int_to_ptr.vmem [resolvable:$true] %s230
    %233 = dma.hbm_to_vmem [thread:$0]  %s220, 16, %s231, %s222
    %s234 = sadd.s32 %s32, 12
    %s235 = sld [smem:[#allocation5 + %s234]]
    %s236 = smul.addr %s235, 16
    %s237 = scalar_lea.hbm %s1, %s236
    %s238 = scalar_lea.vmem [#allocation2], 12
    %s239 = scalar_lea.sflag [#allocation3], 12
    // Predicated region
    $region62: #{tpu_custom_call.1} parent=1 // pred_check
      _
    $region63: #{tpu_custom_call.1} parent=1 // pred_check_branch
      %241 = sbr.rel target = $region65
    $region64: #{tpu_custom_call.1} parent=1 // pred_region
      %242 = sst [smem:[#allocation12]] [#allocation37]
      %243 = sst [smem:[#allocation13]] [#allocation36]
    $region65: #{tpu_custom_call.1} parent=1 // pred_fallthru
      _
    %245 = shalt.err (0)
    %s247 = sshll.u32 %s238, 4
    %s248 = int_to_ptr.vmem [resolvable:$true] %s247
    %250 = dma.hbm_to_vmem [thread:$0]  %s237, 16, %s248, %s239
    %s251 = sadd.s32 %s32, 13
    %s252 = sld [smem:[#allocation5 + %s251]]
    %s253 = smul.addr %s252, 16
    %s254 = scalar_lea.hbm %s1, %s253
    %s255 = scalar_lea.vmem [#allocation2], 13
    %s256 = scalar_lea.sflag [#allocation3], 13
    // Predicated region
    $region66: #{tpu_custom_call.1} parent=1 // pred_check
      _
    $region67: #{tpu_custom_call.1} parent=1 // pred_check_branch
      %258 = sbr.rel target = $region69
    $region68: #{tpu_custom_call.1} parent=1 // pred_region
      %259 = sst [smem:[#allocation12]] [#allocation39]
      %260 = sst [smem:[#allocation13]] [#allocation38]
    $region69: #{tpu_custom_call.1} parent=1 // pred_fallthru
      _
    %262 = shalt.err (0)
    %s264 = sshll.u32 %s255, 4
    %s265 = int_to_ptr.vmem [resolvable:$true] %s264
    %267 = dma.hbm_to_vmem [thread:$0]  %s254, 16, %s265, %s256
    %s268 = sadd.s32 %s32, 14
    %s269 = sld [smem:[#allocation5 + %s268]]
    %s270 = smul.addr %s269, 16
    %s271 = scalar_lea.hbm %s1, %s270
    %s272 = scalar_lea.vmem [#allocation2], 14
    %s273 = scalar_lea.sflag [#allocation3], 14
    // Predicated region
    $region70: #{tpu_custom_call.1} parent=1 // pred_check
      _
    $region71: #{tpu_custom_call.1} parent=1 // pred_check_branch
      %275 = sbr.rel target = $region73
    $region72: #{tpu_custom_call.1} parent=1 // pred_region
      %276 = sst [smem:[#allocation12]] [#allocation41]
      %277 = sst [smem:[#allocation13]] [#allocation40]
    $region73: #{tpu_custom_call.1} parent=1 // pred_fallthru
      _
    %279 = shalt.err (0)
    %s281 = sshll.u32 %s272, 4
    %s282 = int_to_ptr.vmem [resolvable:$true] %s281
    %284 = dma.hbm_to_vmem [thread:$0]  %s271, 16, %s282, %s273
    %s285 = sadd.s32 %s32, 15
    %s286 = sld [smem:[#allocation5 + %s285]]
    %s287 = smul.addr %s286, 16
    %s288 = scalar_lea.hbm %s1, %s287
    %s289 = scalar_lea.vmem [#allocation2], 15
    %s290 = scalar_lea.sflag [#allocation3], 15
    // Predicated region
    $region74: #{tpu_custom_call.1} parent=1 // pred_check
      _
    $region75: #{tpu_custom_call.1} parent=1 // pred_check_branch
      %292 = sbr.rel target = $region77
    $region76: #{tpu_custom_call.1} parent=1 // pred_region
      %293 = sst [smem:[#allocation12]] [#allocation43]
      %294 = sst [smem:[#allocation13]] [#allocation42]
    $region77: #{tpu_custom_call.1} parent=1 // pred_fallthru
      _
    %296 = shalt.err (0)
    %s298 = sshll.u32 %s289, 4
    %s299 = int_to_ptr.vmem [resolvable:$true] %s298
    %301 = dma.hbm_to_vmem [thread:$0]  %s288, 16, %s299, %s290
    %s302 = smul.u32 1, 1
    %s303 = sshll.u32 %s302, 4
    %304 = dma.done [#allocation3], %s303
    %s305 = sshll.u32 %s302, 4
    %306 = dma.done %s52, %s305
    %s307 = sshll.u32 %s302, 4
    %308 = dma.done %s69, %s307
    %s309 = sshll.u32 %s302, 4
    %310 = dma.done %s86, %s309
    %s311 = sshll.u32 %s302, 4
    %312 = dma.done %s103, %s311
    %s313 = sshll.u32 %s302, 4
    %314 = dma.done %s120, %s313
    %s315 = sshll.u32 %s302, 4
    %316 = dma.done %s137, %s315
    %s317 = sshll.u32 %s302, 4
    %318 = dma.done %s154, %s317
    %s319 = sshll.u32 %s302, 4
    %320 = dma.done %s171, %s319
    %s321 = sshll.u32 %s302, 4
    %322 = dma.done %s188, %s321
    %s323 = sshll.u32 %s302, 4
    %324 = dma.done %s205, %s323
    %s325 = sshll.u32 %s302, 4
    %326 = dma.done %s222, %s325
    %s327 = sshll.u32 %s302, 4
    %328 = dma.done %s239, %s327
    %s329 = sshll.u32 %s302, 4
    %330 = dma.done %s256, %s329
    %s331 = sshll.u32 %s302, 4
    %332 = dma.done %s273, %s331
    %s333 = sshll.u32 %s302, 4
    %334 = dma.done %s290, %s333
    %v335 = vld [vmem:[#allocation2] sm:$0xff]
    %v336 = vld [vmem:[#allocation2 + $0x8] sm:$0xff]
    %v337 = vld [vmem:[#allocation6] sm:$0xff]
    %v338 = vld [vmem:[#allocation6 + $0x8] sm:$0xff]
    %v339 = vadd.f32 %v335, %v337
    %v340 = vadd.f32 %v336, %v338
    %341 = vadd.xlane.f32.xlu0 %v339
    %v342 = vpop.xlane.xlu0 %341
    %343 = vadd.xlane.f32.xlu0 %v340
    %v344 = vpop.xlane.xlu0 %343
    %v345 = vrcp.pop 128.0
    %v346 = vmul.f32 %v342, %v345
    %v347 = vmul.f32 %v344, %v345
    %v348 = vsub.f32 %v339, %v346
    %v349 = vsub.f32 %v340, %v347
    %v350 = vmul.f32 %v348, %v348
    %v351 = vmul.f32 %v349, %v349
    %352 = vadd.xlane.f32.xlu0 %v350
    %v353 = vpop.xlane.xlu0 %352
    %354 = vadd.xlane.f32.xlu0 %v351
    %v355 = vpop.xlane.xlu0 %354
    %v356 = vmul.f32 %v353, %v345
    %v357 = vmul.f32 %v355, %v345
    %v358 = vadd.f32 %v356, 1e-05
    %v359 = vadd.f32 %v357, 1e-05
    %v360 = vrsqrt.pop %v358
    %v361 = vrsqrt.pop %v359
    %v362 = vld [vmem:[%s3] sm:$0x1]
    %v363 = vld [vmem:[%s3 + $0x1] sm:$0x1]
    %v364 = vmul.f32 %v348, %v360
    %v365 = vmul.f32 %v349, %v361
    %v366 = vlaneseq
    %v367 = vshrl.u32 %v366, 7
    %v368 = vsub.s32 0, %v367
    %v369 = vrot.slane %v362, %v368
    %v370 = vmul.f32 %v364, %v369
    %v371 = vmul.f32 %v365, %v369
    %v372 = vlaneseq
    %v373 = vshrl.u32 %v372, 7
    %v374 = vsub.s32 0, %v373
    %v375 = vrot.slane %v363, %v374
    %v376 = vadd.f32 %v370, %v375
    %v377 = vadd.f32 %v371, %v375
    %378 = vst [vmem:[#allocation9] sm:$0xff] %v376
    %379 = vst [vmem:[#allocation9 + $0x8] sm:$0xff] %v377
    // Predicated region
    $region78: #{tpu_custom_call.1} parent=1 // pred_check
      _
    $region79: #{tpu_custom_call.1} parent=1 // pred_check_branch
      %381 = sbr.rel (0) target = $region81
    $region80: #{tpu_custom_call.1} parent=1 // pred_region
      %s383 = ssub.s32 256, 256
      %384 = vsyncadd [#allocation8], %s383
      %s385 = sshll.u32 [#allocation9], 4
      %s386 = int_to_ptr.vmem [resolvable:$true] %s385
      %391 = dma.vmem_to_hbm [thread:$0]  %s386, 256, %s4, [#allocation8], 128, 128, 8
    $region81: #{tpu_custom_call.1} parent=1 // pred_fallthru
      _
    // Predicated region
    $region82: #{tpu_custom_call.1} parent=1 // pred_check
      _
    $region83: #{tpu_custom_call.1} parent=1 // pred_check_branch
      %393 = sbr.rel (0) target = $region85
    $region84: #{tpu_custom_call.1} parent=1 // pred_region
      %394 = dma.done [#allocation8], 256
    $region85: #{tpu_custom_call.1} parent=1 // pred_fallthru
      _
    %395 = vsyncpa [#allocation7], 1
    %396 = vsyncpa [#allocation8], 1
  %397 = vsyncmov [#allocation3]
  %s398 = vpop.sfrf %397
  %p399 = scmp.eq.s32.totalorder %s398, 0
  %p400 = pneg %p399
  %402 = shalt.err (%p400)
  %s403 = scalar_lea.sflag [#allocation3], 1
  %404 = vsyncmov %s403
  %s405 = vpop.sfrf %404
  %p406 = scmp.eq.s32.totalorder %s405, 0
  %p407 = pneg %p406
  %409 = shalt.err (%p407)
  %s410 = scalar_lea.sflag [#allocation3], 2
  %411 = vsyncmov %s410
  %s412 = vpop.sfrf %411
  %p413 = scmp.eq.s32.totalorder %s412, 0
  %p414 = pneg %p413
  %416 = shalt.err (%p414)
  %s417 = scalar_lea.sflag [#allocation3], 3
  %418 = vsyncmov %s417
  %s419 = vpop.sfrf %418
  %p420 = scmp.eq.s32.totalorder %s419, 0
  %p421 = pneg %p420
  %423 = shalt.err (%p421)
  %s424 = scalar_lea.sflag [#allocation3], 4
  %425 = vsyncmov %s424
  %s426 = vpop.sfrf %425
  %p427 = scmp.eq.s32.totalorder %s426, 0
  %p428 = pneg %p427
  %430 = shalt.err (%p428)
  %s431 = scalar_lea.sflag [#allocation3], 5
  %432 = vsyncmov %s431
  %s433 = vpop.sfrf %432
  %p434 = scmp.eq.s32.totalorder %s433, 0
  %p435 = pneg %p434
  %437 = shalt.err (%p435)
  %s438 = scalar_lea.sflag [#allocation3], 6
  %439 = vsyncmov %s438
  %s440 = vpop.sfrf %439
  %p441 = scmp.eq.s32.totalorder %s440, 0
  %p442 = pneg %p441
  %444 = shalt.err (%p442)
  %s445 = scalar_lea.sflag [#allocation3], 7
  %446 = vsyncmov %s445
  %s447 = vpop.sfrf %446
  %p448 = scmp.eq.s32.totalorder %s447, 0
  %p449 = pneg %p448
  %451 = shalt.err (%p449)
  %s452 = scalar_lea.sflag [#allocation3], 8
  %453 = vsyncmov %s452
  %s454 = vpop.sfrf %453
  %p455 = scmp.eq.s32.totalorder %s454, 0
  %p456 = pneg %p455
  %458 = shalt.err (%p456)
  %s459 = scalar_lea.sflag [#allocation3], 9
  %460 = vsyncmov %s459
  %s461 = vpop.sfrf %460
  %p462 = scmp.eq.s32.totalorder %s461, 0
  %p463 = pneg %p462
  %465 = shalt.err (%p463)
  %s466 = scalar_lea.sflag [#allocation3], 10
  %467 = vsyncmov %s466
  %s468 = vpop.sfrf %467
  %p469 = scmp.eq.s32.totalorder %s468, 0
  %p470 = pneg %p469
  %472 = shalt.err (%p470)
  %s473 = scalar_lea.sflag [#allocation3], 11
  %474 = vsyncmov %s473
  %s475 = vpop.sfrf %474
  %p476 = scmp.eq.s32.totalorder %s475, 0
  %p477 = pneg %p476
  %479 = shalt.err (%p477)
  %s480 = scalar_lea.sflag [#allocation3], 12
  %481 = vsyncmov %s480
  %s482 = vpop.sfrf %481
  %p483 = scmp.eq.s32.totalorder %s482, 0
  %p484 = pneg %p483
  %486 = shalt.err (%p484)
  %s487 = scalar_lea.sflag [#allocation3], 13
  %488 = vsyncmov %s487
  %s489 = vpop.sfrf %488
  %p490 = scmp.eq.s32.totalorder %s489, 0
  %p491 = pneg %p490
  %493 = shalt.err (%p491)
  %s494 = scalar_lea.sflag [#allocation3], 14
  %495 = vsyncmov %s494
  %s496 = vpop.sfrf %495
  %p497 = scmp.eq.s32.totalorder %s496, 0
  %p498 = pneg %p497
  %500 = shalt.err (%p498)
  %s501 = scalar_lea.sflag [#allocation3], 15
  %502 = vsyncmov %s501
  %s503 = vpop.sfrf %502
  %p504 = scmp.eq.s32.totalorder %s503, 0
  %p505 = pneg %p504
  %507 = shalt.err (%p505)

</llo_original>
